<compile_context>
chip_gen: v5e
topology: v5e:2x2
jax: 0.10.0
libtpu: 0.0.40
codegen_flags: <defaults>
</compile_context>

<pallas_src>
import functools
import itertools

import numpy as np
import jax
import jax.numpy as jnp
from jax import lax
from jax.experimental import pallas as pl
from jax.experimental.pallas import tpu as pltpu

LANE = 128          # lane width / channel padding granularity
MXU_K_PAD = 256     # stage-2 contraction padding (v6e/v7x 256-wide MXU)


def _round_up(x, m):
    return (x + m - 1) // m * m


def fold_bn(gamma, beta, mean, var, eps=1e-5):
    scale = gamma / jnp.sqrt(var + eps)
    shift = beta - mean * scale
    return scale, shift


# ----------------------------------------------------------------------------
# Host-side parameter prep: fold BN scale into weights, pad channels to lane
# multiples, pad the K*Cmid contraction to an MXU multiple, cast weights to bf16.
# ----------------------------------------------------------------------------
def prepare_params(params, *, lane_pad=True):
    K, c_mid, _ = params["w2"].shape
    cin, _ = params["w1"].shape
    c_exp = params["w3"].shape[1]

    s1, b1 = fold_bn(*params["bn1"])
    s2, b2 = fold_bn(*params["bn2"])
    s3, b3 = fold_bn(*params["bn3"])
    sd, bd = fold_bn(*params["bnd"])

    # Fold BN scale into the conv weights (in f32, before the bf16 cast).
    w1 = params["w1"] * s1[None, :]
    w2 = params["w2"] * s2[None, None, :]
    w3 = params["w3"] * s3[None, :]
    wd = params["wd"] * sd[None, :]

    if lane_pad:
        cin_p = _round_up(cin, LANE)
        c_mid_p = _round_up(c_mid, LANE)
        c_exp_p = _round_up(c_exp, LANE)
    else:
        cin_p, c_mid_p, c_exp_p = cin, c_mid, c_exp

    w1 = jnp.pad(w1, ((0, cin_p - cin), (0, c_mid_p - c_mid)))
    wd = jnp.pad(wd, ((0, cin_p - cin), (0, c_exp_p - c_exp)))
    w2 = jnp.pad(w2, ((0, 0), (0, c_mid_p - c_mid), (0, c_mid_p - c_mid)))
    w3 = jnp.pad(w3, ((0, c_mid_p - c_mid), (0, c_exp_p - c_exp)))
    b1 = jnp.pad(b1, (0, c_mid_p - c_mid))
    b2 = jnp.pad(b2, (0, c_mid_p - c_mid))
    b3 = jnp.pad(b3, (0, c_exp_p - c_exp))
    bd = jnp.pad(bd, (0, c_exp_p - c_exp))

    kc = K * c_mid_p
    kc_pad = _round_up(kc, MXU_K_PAD) if lane_pad else kc
    w2f = w2.reshape(kc, c_mid_p)
    w2f = jnp.pad(w2f, ((0, kc_pad - kc), (0, 0)))      # zero rows: pad cols of g no-op

    bf16 = jnp.bfloat16
    return dict(
        K=K, cin=cin, c_mid=c_mid, c_exp=c_exp,
        cin_p=cin_p, c_mid_p=c_mid_p, c_exp_p=c_exp_p, kc_pad=kc_pad,
        w1=w1.astype(bf16), w2f=w2f.astype(bf16),
        w3=w3.astype(bf16), wd=wd.astype(bf16),
        b1=b1.reshape(1, -1), b2=b2.reshape(1, -1),
        b3=b3.reshape(1, -1), bd=bd.reshape(1, -1),
    )


# ----------------------------------------------------------------------------
# Kernel 1: conv1(1x1) + bn1  -> f1 (bf16).  Row-tiled, lane-dense output.
# ----------------------------------------------------------------------------
def _stage1_kernel(x_ref, w1_ref, b1_ref, f1_ref):
    y = jnp.dot(x_ref[...], w1_ref[...], preferred_element_type=jnp.float32)
    f1_ref[...] = (y + b1_ref[...]).astype(f1_ref.dtype)


def stage1_conv_bn(feat, w1, b1, tile_m, vmem_limit):
    n, cin_p = feat.shape
    c_mid_p = w1.shape[1]
    return pl.pallas_call(
        _stage1_kernel,
        out_shape=jax.ShapeDtypeStruct((n, c_mid_p), jnp.bfloat16),
        grid=(n // tile_m,),
        in_specs=[
            pl.BlockSpec((tile_m, cin_p), lambda i: (i, 0)),
            pl.BlockSpec((cin_p, c_mid_p), lambda i: (0, 0)),
            pl.BlockSpec((1, c_mid_p), lambda i: (0, 0)),
        ],
        out_specs=pl.BlockSpec((tile_m, c_mid_p), lambda i: (i, 0)),
        compiler_params=pltpu.CompilerParams(
            dimension_semantics=("parallel",),
            vmem_limit_bytes=vmem_limit),
    )(feat, w1, b1)


# ----------------------------------------------------------------------------
# Kernel 2 (fused): in-VMEM neighbor gather  +  sparse 3x3x3 conv (one matmul
# over K*Cmid) + bn2  +  conv3(1x1) + bn3  +  recomputed downsample(1x1)+bn_d
# + residual add + ReLU.  nbr_idx lives in SMEM (scalar prefetch); f1 is
# resident in VMEM (constant index_map -> DMA'd once); nothing but `out`
# is written to HBM.
# ----------------------------------------------------------------------------
def _stage2_kernel(num_offsets, nbr_ref, f1_ref, x_ref, w2_ref, b2_ref,
                   w3_ref, b3_ref, wd_ref, bd_ref, o_ref, g_ref):
    rows = o_ref.shape[0]
    c_mid_p = f1_ref.shape[1]
    kc = num_offsets * c_mid_p
    kc_pad = g_ref.shape[1]
    base = pl.program_id(0) * rows

    # --- in-kernel gather: build g[tile_m, K*Cmid] in VMEM scratch ------------
    def gather_row(r, carry):
        for k in range(num_offsets):                       # static unroll over 27
            idx = nbr_ref[(base + r) * num_offsets + k]    # SMEM scalar read
            row = f1_ref[pl.ds(jnp.maximum(idx, 0), 1), :] # dynamic VMEM row load
            row = row * (idx >= 0).astype(row.dtype)       # -1 => missing neighbor
            g_ref[pl.ds(r, 1), k * c_mid_p:(k + 1) * c_mid_p] = row
        return carry

    lax.fori_loop(0, rows, gather_row, 0, unroll=False)

    # Zero the MXU-alignment pad columns every step (megacore-safe; w2 pad rows
    # are also zero, but uninitialized VMEM could hold NaN bit patterns).
    if kc_pad > kc:
        g_ref[:, kc:] = jnp.zeros((rows, kc_pad - kc), dtype=g_ref.dtype)

    # --- 3x3x3 sparse conv collapsed into one MXU matmul, + bn2 shift ---------
    f2 = jnp.dot(g_ref[...], w2_ref[...], preferred_element_type=jnp.float32)
    f2 = f2 + b2_ref[...]

    # --- conv3 (1x1) + bn3 shift (f2 never leaves VMEM) -----------------------
    y = jnp.dot(f2.astype(w3_ref.dtype), w3_ref[...],
                preferred_element_type=jnp.float32) + b3_ref[...]

    # --- downsample conv (1x1) + bn_d shift, recomputed from the feat tile ----
    ds = jnp.dot(x_ref[...], wd_ref[...],
                 preferred_element_type=jnp.float32) + bd_ref[...]

    o_ref[...] = jnp.maximum(y + ds, 0.0).astype(o_ref.dtype)


def stage2_fused(nbr_flat, f1, feat, p, tile_m, vmem_limit):
    n_pad, c_mid_p = f1.shape
    cin_p = feat.shape[1]
    c_exp_p = p["c_exp_p"]
    kc_pad = p["kc_pad"]
    grid = (n_pad // tile_m,)

    kernel = functools.partial(_stage2_kernel, p["K"])

    # NOTE: if profiling shows exposed DMA on the feat/f1 streams, raise their
    # pipelining depth with pipeline_mode=pl.Buffered(3) on those BlockSpecs only.
    return pl.pallas_call(
        kernel,
        out_shape=jax.ShapeDtypeStruct((n_pad, c_exp_p), jnp.float32),
        grid_spec=pltpu.PrefetchScalarGridSpec(
            num_scalar_prefetch=1,                              # nbr_flat -> SMEM
            grid=grid,
            in_specs=[
                pl.BlockSpec((n_pad, c_mid_p), lambda i, nbr: (0, 0)),    # f1 (VMEM-resident)
                pl.BlockSpec((tile_m, cin_p), lambda i, nbr: (i, 0)),     # feat tile
                pl.BlockSpec((kc_pad, c_mid_p), lambda i, nbr: (0, 0)),   # w2f (scaled)
                pl.BlockSpec((1, c_mid_p), lambda i, nbr: (0, 0)),        # bn2 shift
                pl.BlockSpec((c_mid_p, c_exp_p), lambda i, nbr: (0, 0)),  # w3 (scaled)
                pl.BlockSpec((1, c_exp_p), lambda i, nbr: (0, 0)),        # bn3 shift
                pl.BlockSpec((cin_p, c_exp_p), lambda i, nbr: (0, 0)),    # wd (scaled)
                pl.BlockSpec((1, c_exp_p), lambda i, nbr: (0, 0)),        # bn_d shift
            ],
            out_specs=pl.BlockSpec((tile_m, c_exp_p), lambda i, nbr: (i, 0)),
            scratch_shapes=[pltpu.VMEM((tile_m, kc_pad), jnp.bfloat16)],  # gather tile
        ),
        compiler_params=pltpu.CompilerParams(
            dimension_semantics=("parallel",),      # v7x: shards rows across 2 TCs
            vmem_limit_bytes=vmem_limit),
    )(nbr_flat, f1, feat, p["w2f"], p["b2"], p["w3"], p["b3"], p["wd"], p["bd"])


# ----------------------------------------------------------------------------
# Glue: kernel map (neighbor index table, host)
# ----------------------------------------------------------------------------
def build_kernel_map(coords_np, ks=3, dilation=1):
    """coords_np: [N,3] int.  Returns nbr_idx [N, ks^3] with -1 where no neighbor."""
    lut = {tuple(c): i for i, c in enumerate(coords_np.tolist())}
    r = ks // 2
    offsets = list(itertools.product(range(-r, r + 1), repeat=3))
    n = coords_np.shape[0]
    nbr = np.full((n, len(offsets)), -1, dtype=np.int32)
    for i, c in enumerate(coords_np.tolist()):
        for k, off in enumerate(offsets):
            key = (c[0] + off[0] * dilation, c[1] + off[1] * dilation,
                   c[2] + off[2] * dilation)
            nbr[i, k] = lut.get(key, -1)
    return nbr  # [N, K]


# ----------------------------------------------------------------------------
# Bottleneck forward
# ----------------------------------------------------------------------------
def bottleneck_forward(feat, nbr_idx, params, tile_m=512,
                       vmem_limit_stage1=32 * 1024 * 1024,
                       vmem_limit_stage2=48 * 1024 * 1024):
    # vmem_limit_stage2 is sized so the resident f1 + double-buffered tiles stay
    # under v7x's 64 MiB/TC (v5e/v6e have 128 MiB physical, 16/32 MiB default scoped).
    n, cin = feat.shape
    p = prepare_params(params)

    tile_m = _round_up(tile_m, 16)
    tm = min(tile_m, _round_up(n, 16))
    n_pad = _round_up(n, tm)

    feat_p = jnp.pad(feat, ((0, n_pad - n), (0, p["cin_p"] - cin))).astype(jnp.bfloat16)
    nbr_p = jnp.pad(nbr_idx.astype(jnp.int32), ((0, n_pad - n), (0, 0)),
                    constant_values=-1)
    nbr_flat = nbr_p.reshape(-1)           # 1D -> compact SMEM layout

    f1 = stage1_conv_bn(feat_p, p["w1"], p["b1"], tm, vmem_limit_stage1)
    out = stage2_fused(nbr_flat, f1, feat_p, p, tm, vmem_limit_stage2)
    return out[:n, :p["c_exp"]]


def bottleneck_reference(feat, nbr_idx, params):
    """Pure-JAX reference mirroring the same folded-weight / bf16-matmul /
    f32-epilogue arithmetic (padding in the kernel path is an exact no-op)."""
    p = prepare_params(params, lane_pad=False)
    bf16 = jnp.bfloat16
    x = feat.astype(bf16)
    f1 = (jnp.dot(x, p["w1"], preferred_element_type=jnp.float32)
          + p["b1"]).astype(bf16)
    idx = jnp.maximum(nbr_idx, 0)
    g = jnp.take(f1, idx, axis=0) * (nbr_idx >= 0)[..., None].astype(bf16)
    g = g.reshape(feat.shape[0], -1)
    f2 = jnp.dot(g, p["w2f"], preferred_element_type=jnp.float32) + p["b2"]
    y = jnp.dot(f2.astype(bf16), p["w3"], preferred_element_type=jnp.float32) + p["b3"]
    ds = jnp.dot(x, p["wd"], preferred_element_type=jnp.float32) + p["bd"]
    return jnp.maximum(y + ds, 0.0)


# ----------------------------------------------------------------------------
def make_params(key, inc, outc, ks=3, expansion=4):
    ko = outc * expansion
    keys = jax.random.split(key, 8)

    def bn(k, c):
        k1, k2, k3, k4 = jax.random.split(k, 4)
        gamma = 1.0 + 0.1 * jax.random.normal(k1, (c,), jnp.float32)
        beta = 0.1 * jax.random.normal(k2, (c,), jnp.float32)
        mean = 0.1 * jax.random.normal(k3, (c,), jnp.float32)
        var = jnp.abs(jax.random.normal(k4, (c,), jnp.float32)) + 0.5
        return (gamma, beta, mean, var)

    return {
        "w1": 0.1 * jax.random.normal(keys[0], (inc, outc), jnp.float32),
        "w2": 0.1 * jax.random.normal(keys[1], (ks ** 3, outc, outc), jnp.float32),
        "w3": 0.1 * jax.random.normal(keys[2], (outc, ko), jnp.float32),
        "wd": 0.1 * jax.random.normal(keys[3], (inc, ko), jnp.float32),
        "bn1": bn(keys[4], outc),
        "bn2": bn(keys[5], outc),
        "bn3": bn(keys[6], ko),
        "bnd": bn(keys[7], ko),
    }


if __name__ == "__main__":
    # Small synthetic sparse tensor: 200 occupied voxels in a 12^3 grid, 16 channels.
    inc, outc, ks, N, expansion = 16, 8, 3, 200, 4
    rng = np.random.default_rng(0)
    G = 12
    flat = rng.choice(G ** 3, size=N, replace=False)
    coords_np = np.stack(np.unravel_index(flat, (G, G, G)), axis=1).astype(np.int32)
    nbr_idx = jnp.asarray(build_kernel_map(coords_np, ks=ks, dilation=1))

    key = jax.random.PRNGKey(0)
    kfeat, kparam = jax.random.split(key)
    feat = jax.random.normal(kfeat, (N, inc), jnp.float32)
    params = make_params(kparam, inc, outc, ks=ks, expansion=expansion)

    # tile_m=64 so the test exercises multiple grid steps and row padding
    # (production default is 512).
    out = jax.block_until_ready(bottleneck_forward(feat, nbr_idx, params, tile_m=64))
    ref = jax.block_until_ready(bottleneck_reference(feat, nbr_idx, params))

    assert out.shape == (N, outc * expansion)
    np.testing.assert_allclose(np.asarray(out), np.asarray(ref), rtol=2e-2, atol=2e-2)

    print("KERNEL_OK")
</pallas_src>

<mosaic_0001>
module attributes {stable_mosaic.version = 11 : i64} {
  func.func @_stage1_kernel(%arg0: i32, %arg1: memref<64x128xbf16, #tpu.memory_space<vmem>>, %arg2: memref<128x128xbf16, #tpu.memory_space<vmem>>, %arg3: memref<1x128xf32, #tpu.memory_space<vmem>>, %arg4: memref<64x128xbf16, #tpu.memory_space<vmem>>) attributes {dimension_semantics = [#tpu.dimension_semantics<parallel>], iteration_bounds = array<i64: 4>, scalar_prefetch = 0 : i64, scratch_operands = 0 : i64, tpu.core_type = #tpu.core_type<tc>, window_params = [{transform_indices = @transform_0, window_bounds = array<i64: 64, 128>}, {pipeline_mode = #tpu.pipeline_mode<synchronous>, transform_indices = @transform_1, window_bounds = array<i64: 128, 128>}, {pipeline_mode = #tpu.pipeline_mode<synchronous>, transform_indices = @transform_2, window_bounds = array<i64: 1, 128>}, {transform_indices = @transform_3, window_bounds = array<i64: 64, 128>}]} {
    %c0 = arith.constant 0 : index
    %c0_0 = arith.constant 0 : index
    %0 = vector.load %arg1[%c0, %c0_0] : memref<64x128xbf16, #tpu.memory_space<vmem>>, vector<64x128xbf16>
    %c0_1 = arith.constant 0 : index
    %c0_2 = arith.constant 0 : index
    %1 = vector.load %arg2[%c0_1, %c0_2] : memref<128x128xbf16, #tpu.memory_space<vmem>>, vector<128x128xbf16>
    %cst = arith.constant dense<0.000000e+00> : vector<64x128xf32>
    %2 = tpu.matmul %0, %1, %cst {dimension_numbers = #tpu.dot_dimension_numbers<[1], [0], [0], [1], [0, 0, 1, 1], [], []>} : vector<64x128xbf16>, vector<128x128xbf16>, vector<64x128xf32> -> vector<64x128xf32>
    %c0_3 = arith.constant 0 : index
    %c0_4 = arith.constant 0 : index
    %3 = vector.load %arg3[%c0_3, %c0_4] : memref<1x128xf32, #tpu.memory_space<vmem>>, vector<1x128xf32>
    %4 = vector.broadcast %3 : vector<1x128xf32> to vector<64x128xf32>
    %5 = arith.addf %2, %4 : vector<64x128xf32>
    %6 = arith.truncf %5 : vector<64x128xf32> to vector<64x128xbf16>
    %c0_5 = arith.constant 0 : index
    %c0_6 = arith.constant 0 : index
    %7 = vector.load %arg4[%c0_5, %c0_6] : memref<64x128xbf16, #tpu.memory_space<vmem>>, vector<64x128xbf16>
    tpu.vector_store %arg4[%c0_5, %c0_6], %6 {strides = array<i32>} : memref<64x128xbf16, #tpu.memory_space<vmem>>, vector<64x128xbf16>,
    return
  }
  func.func @transform_0(%arg0: i32) -> (i32, i32) {
    %c0_i32 = arith.constant 0 : i32
    %c0_i32_0 = arith.constant 0 : i32
    return %arg0, %c0_i32 : i32, i32
  }
  func.func @transform_1(%arg0: i32) -> (i32, i32) {
    %c0_i32 = arith.constant 0 : i32
    %c0_i32_0 = arith.constant 0 : i32
    %c0_i32_1 = arith.constant 0 : i32
    return %c0_i32, %c0_i32_0 : i32, i32
  }
  func.func @transform_2(%arg0: i32) -> (i32, i32) {
    %c0_i32 = arith.constant 0 : i32
    %c0_i32_0 = arith.constant 0 : i32
    %c0_i32_1 = arith.constant 0 : i32
    return %c0_i32, %c0_i32_0 : i32, i32
  }
  func.func @transform_3(%arg0: i32) -> (i32, i32) {
    %c0_i32 = arith.constant 0 : i32
    %c0_i32_0 = arith.constant 0 : i32
    return %arg0, %c0_i32 : i32, i32
  }
}

</mosaic_0001>

<llo_original>
// kernel: tpu_custom_call.1
$region0: #{tpu_custom_call.1}
  #allocation0 [shape = 'u32[]', space=smem, size = 0x4, offset = 0x4, fixed_abs, tag = 'smem constant byte address 0x4 - core index']
  #allocation1 [shape = 'u32[72,128]{1,0:T(1,128)}', space=vmem, size = 0x9000, scoped, tag = 'internal scratch']
  %s0 = inlined_call_operand.hbm [shape: bf16[256,128], index: 0, kind: input, shape index: {}]
  %s1 = inlined_call_operand.hbm [shape: bf16[128,128], index: 1, kind: input, shape index: {}]
  %s2 = inlined_call_operand.vmem [shape: f32[1,128], index: 2, kind: input, shape index: {}]
  %s3 = inlined_call_operand.hbm [shape: bf16[256,128], index: 3, kind: output, shape index: {}]
  %s4 = sld [smem:[#allocation0]]
  $region53: #{tpu_custom_call.1} parent=0
    _
  %s6 = ssub.s32 1, %s4
  %s7 = scalar_select 0, %s6, %s4
  $region1: #{tpu_custom_call.1} parent=0
    #allocation2 [shape = 'u8[32768]{0}', space=vmem, size = 0x8000, scoped, tag = 'input window, operand 0']
    #allocation3 [shape = 's32[2]{0}', space=sflag, size = 0x8, scoped, tag = 'scoped memory for tpu_custom_call.1']
    #allocation4 [shape = 's32[2]{0}', space=sflag, size = 0x8, scoped, tag = 'scoped memory for tpu_custom_call.1']
    #allocation5 [shape = 'u8[32768]{0}', space=vmem, size = 0x8000, scoped, tag = 'input window, operand 1, single buffered']
    #allocation6 [shape = 's32[1]{0}', space=sflag, size = 0x4, scoped, tag = 'scoped memory for tpu_custom_call.1']
    #allocation7 [shape = 'u8[32768]{0}', space=vmem, size = 0x8000, scoped, tag = 'output window, operand 0']
    %8 = vsyncpa [#allocation3], 0
    %s9 = scalar_lea.sflag [#allocation3], 1
    %10 = vsyncpa %s9, 0
    %11 = vsyncpa [#allocation6], 0
    %12 = vsyncpa [#allocation4], 0
    %s13 = scalar_lea.sflag [#allocation4], 1
    %14 = vsyncpa %s13, 0
    loop: start=0, step=1, limit=6
    $region2: #{tpu_custom_call.1} parent=1 // loop_pre_header
      _
    $region3: #{tpu_custom_call.1} parent=1 // loop_header
      %s16 = sphi 0, %s20
      %p17 = scmp.ge.s32.totalorder %s16, 6
      %s26 = sphi 0, %s28
      %s29 = sphi 0, %s26
      %s30 = sphi 0, %s29
      %s46 = sphi 0, %s30
      %s50 = sphi 0, %s50
      %s52 = sphi 0, %s50
      %s53 = sphi 0, %s52
      %s67 = sphi 0, %s53
      %s71 = sphi 0, %s71
      %s73 = sphi 0, %s71
      %s74 = sphi 0, %s73
      %s88 = sphi 0, %s74
      %s94 = sphi 0, %s96
      %s97 = sphi 0, %s94
      %s98 = sphi 0, %s97
      %s114 = sphi 0, %s98
    $region4: #{tpu_custom_call.1} parent=1 // loop_header_branch
      %19 = sbr.rel (%p17) target = $region8
    $region5: #{tpu_custom_call.1} parent=1 // loop_body
      %s21 = ssub.s32 %s16, 1
      %s22 = ssub.s32 %s16, 2
      %s23 = sadd.s32 %s16, 1
      %s24 = ssub.s32 %s16, %s23
      %p25 = scmp.eq.s32.totalorder %s24, 0
      %s27 = sadd.s32 %s26, 1
      %s28 = scalar_select %p25, %s26, %s27
      %p31 = pneg %p25
      %p32 = scmp.eq.s32.totalorder %s16, 3
      %p33 = por %p31, %p32
      %p34 = scmp.ne.s32.totalorder %s26, %s29
      %p35 = scmp.eq.s32.totalorder %s16, 0
      %p36 = por %p34, %p35
      %p37 = scmp.ne.s32.totalorder %s26, %s29
      %p38 = scmp.eq.s32.totalorder %s21, 3
      %p39 = por %p37, %p38
      %p40 = scmp.ne.s32.totalorder %s29, %s30
      %p41 = scmp.eq.s32.totalorder %s21, 0
      %p42 = por %p40, %p41
      %p43 = scmp.ne.s32.totalorder %s29, %s30
      %p44 = scmp.eq.s32.totalorder %s22, 3
      %p45 = por %p43, %p44
      %p47 = scmp.ne.s32.totalorder %s30, %s46
      %p48 = scmp.eq.s32.totalorder %s22, 0
      %p49 = por %p47, %p48
      %s51 = sadd.s32 %s50, 1
      %p54 = scmp.eq.s32.totalorder %s16, 3
      %p55 = scmp.ne.s32.totalorder %s50, %s52
      %p56 = scmp.eq.s32.totalorder %s16, 0
      %p57 = por %p55, %p56
      %p58 = scmp.ne.s32.totalorder %s50, %s52
      %p59 = scmp.eq.s32.totalorder %s21, 3
      %p60 = por %p58, %p59
      %p61 = scmp.ne.s32.totalorder %s52, %s53
      %p62 = scmp.eq.s32.totalorder %s21, 0
      %p63 = por %p61, %p62
      %p64 = scmp.ne.s32.totalorder %s52, %s53
      %p65 = scmp.eq.s32.totalorder %s22, 3
      %p66 = por %p64, %p65
      %p68 = scmp.ne.s32.totalorder %s53, %s67
      %p69 = scmp.eq.s32.totalorder %s22, 0
      %p70 = por %p68, %p69
      %s72 = sadd.s32 %s71, 1
      %p75 = scmp.eq.s32.totalorder %s16, 3
      %p76 = scmp.ne.s32.totalorder %s71, %s73
      %p77 = scmp.eq.s32.totalorder %s16, 0
      %p78 = por %p76, %p77
      %p79 = scmp.ne.s32.totalorder %s71, %s73
      %p80 = scmp.eq.s32.totalorder %s21, 3
      %p81 = por %p79, %p80
      %p82 = scmp.ne.s32.totalorder %s73, %s74
      %p83 = scmp.eq.s32.totalorder %s21, 0
      %p84 = por %p82, %p83
      %p85 = scmp.ne.s32.totalorder %s73, %s74
      %p86 = scmp.eq.s32.totalorder %s22, 3
      %p87 = por %p85, %p86
      %p89 = scmp.ne.s32.totalorder %s74, %s88
      %p90 = scmp.eq.s32.totalorder %s22, 0
      %p91 = por %p89, %p90
      %s92 = ssub.s32 %s16, %s23
      %p93 = scmp.eq.s32.totalorder %s92, 0
      %s95 = sadd.s32 %s94, 1
      %s96 = scalar_select %p93, %s94, %s95
      %p99 = pneg %p93
      %p100 = scmp.eq.s32.totalorder %s16, 3
      %p101 = por %p99, %p100
      %p102 = scmp.ne.s32.totalorder %s94, %s97
      %p103 = scmp.eq.s32.totalorder %s16, 0
      %p104 = por %p102, %p103
      %p105 = scmp.ne.s32.totalorder %s94, %s97
      %p106 = scmp.eq.s32.totalorder %s21, 3
      %p107 = por %p105, %p106
      %p108 = scmp.ne.s32.totalorder %s97, %s98
      %p109 = scmp.eq.s32.totalorder %s21, 0
      %p110 = por %p108, %p109
      %p111 = scmp.ne.s32.totalorder %s97, %s98
      %p112 = scmp.eq.s32.totalorder %s22, 3
      %p113 = por %p111, %p112
      %p115 = scmp.ne.s32.totalorder %s98, %s114
      %p116 = scmp.eq.s32.totalorder %s22, 0
      %p117 = por %p115, %p116
      %p118 = scmp.le.s32.totalorder 1, %s16
      %p119 = scmp.lt.s32.totalorder %s16, 5
      %p120 = pnand %p118, %p119
      %p121 = pneg %p120
      // Predicated region
      $region9: #{tpu_custom_call.1} parent=5 // pred_check
        _
      $region10: #{tpu_custom_call.1} parent=5 // pred_check_branch
        %123 = sbr.rel (%p120) target = $region12
      $region11: #{tpu_custom_call.1} parent=5 // pred_region
        %s124 = ssub.s32 %s16, 1
        // Predicated region
        $region13: #{tpu_custom_call.1} parent=11 // pred_check
          %p125 = pneg %p63
        $region14: #{tpu_custom_call.1} parent=11 // pred_check_branch
          %127 = sbr.rel (%p125) target = $region16
        $region15: #{tpu_custom_call.1} parent=11 // pred_region
          %129 = vsyncadd [#allocation6], 0
          %s130 = sshll.u32 %s1, 4
          %s131 = int_to_ptr.hbm [resolvable:$true] %s130
          %s132 = sshll.u32 [#allocation5], 4
          %s133 = int_to_ptr.vmem [resolvable:$true] %s132
          %138 = dma.hbm_to_vmem [thread:$0]  %s131, 1024, %s133, [#allocation6], 64, 64, 4
        $region16: #{tpu_custom_call.1} parent=11 // pred_fallthru
          _
        // Predicated region
        $region17: #{tpu_custom_call.1} parent=11 // pred_check
          %p139 = pneg %p84
        $region18: #{tpu_custom_call.1} parent=11 // pred_check_branch
          %141 = sbr.rel (%p139) target = $region20
        $region19: #{tpu_custom_call.1} parent=11 // pred_region
          _
        $region20: #{tpu_custom_call.1} parent=11 // pred_fallthru
          _
      $region12: #{tpu_custom_call.1} parent=5 // pred_fallthru
        _
      %p142 = scmp.lt.s32.totalorder %s16, 4
      // Predicated region
      $region21: #{tpu_custom_call.1} parent=5 // pred_check
        %p143 = pneg %p142
      $region22: #{tpu_custom_call.1} parent=5 // pred_check_branch
        %145 = sbr.rel (%p143) target = $region24
      $region23: #{tpu_custom_call.1} parent=5 // pred_region
        // Predicated region
        $region25: #{tpu_custom_call.1} parent=23 // pred_check
          %p146 = pneg %p36
        $region26: #{tpu_custom_call.1} parent=23 // pred_check_branch
          %148 = sbr.rel (%p146) target = $region28
        $region27: #{tpu_custom_call.1} parent=23 // pred_region
          %s149 = sand.u32 %s26, 1
          %s150 = scalar_lea.sflag [#allocation3], %s149
          %s151 = sand.u32 %s26, 1
          %s152 = smul.addr %s151, 32
          %s153 = scalar_lea.vmem [#allocation2], %s152
          %s154 = smul.u32 8, %s16
          %156 = vsyncadd %s150, 0
          %s157 = smul.addr %s154, 4
          %s158 = scalar_lea.hbm %s0, %s157
          %s159 = sshll.u32 %s158, 4
          %s160 = int_to_ptr.hbm [resolvable:$true] %s159
          %s161 = sshll.u32 %s153, 4
          %s162 = int_to_ptr.vmem [resolvable:$true] %s161
          %167 = dma.hbm_to_vmem [thread:$0]  %s160, 512, %s162, %s150, 64, 64, 4
        $region28: #{tpu_custom_call.1} parent=23 // pred_fallthru
          _
      $region24: #{tpu_custom_call.1} parent=5 // pred_fallthru
        _
      %p168 = scmp.le.s32.totalorder 1, %s16
      %p169 = scmp.lt.s32.totalorder %s16, 5
      %p170 = pnand %p168, %p169
      %p171 = pneg %p170
      // Predicated region
      $region29: #{tpu_custom_call.1} parent=5 // pred_check
        _
      $region30: #{tpu_custom_call.1} parent=5 // pred_check_branch
        %173 = sbr.rel (%p170) target = $region32
      $region31: #{tpu_custom_call.1} parent=5 // pred_region
        %s174 = ssub.s32 %s16, 1
        %s175 = sand.u32 %s29, 1
        %s176 = scalar_lea.sflag [#allocation3], %s175
        %s177 = sand.u32 %s29, 1
        %s178 = smul.addr %s177, 32
        %s179 = scalar_lea.vmem [#allocation2], %s178
        // Predicated region
        $region33: #{tpu_custom_call.1} parent=31 // pred_check
          %p180 = pneg %p42
        $region34: #{tpu_custom_call.1} parent=31 // pred_check_branch
          %182 = sbr.rel (%p180) target = $region36
        $region35: #{tpu_custom_call.1} parent=31 // pred_region
          %184 = dma.done %s176, 512
        $region36: #{tpu_custom_call.1} parent=31 // pred_fallthru
          _
        // Predicated region
        $region37: #{tpu_custom_call.1} parent=31 // pred_check
          %p185 = pneg %p63
        $region38: #{tpu_custom_call.1} parent=31 // pred_check_branch
          %187 = sbr.rel (%p185) target = $region40
        $region39: #{tpu_custom_call.1} parent=31 // pred_region
          %189 = dma.done [#allocation6], 1024
        $region40: #{tpu_custom_call.1} parent=31 // pred_fallthru
          _
        %s190 = sand.u32 %s29, 1
        %s191 = scalar_lea.sflag [#allocation3], %s190
        %s192 = sand.u32 %s29, 1
        %s193 = smul.addr %s192, 32
        %s194 = scalar_lea.vmem [#allocation2], %s193
        %p195 = pneg %p42
        %p196 = pneg %p39
        %p197 = pneg %p63
        %p198 = pneg %p60
        %p199 = pneg %p84
        %p200 = pneg %p81
        %p201 = pneg %p110
        %p202 = pneg %p107
        %s203 = sand.u32 %s97, 1
        %s204 = scalar_lea.sflag [#allocation4], %s203
        %s205 = sand.u32 %s97, 1
        %s206 = smul.addr %s205, 32
        %s207 = scalar_lea.vmem [#allocation7], %s206
        %s208 = smul.u32 8, %s21
        %s209 = smul.u32 8, %s21
        %v210 = vld [vmem:[%s179] sm:$0xf]
        %v211 = vld [vmem:[%s179 + $0x4] sm:$0xf]
        %v212 = vld [vmem:[%s179 + $0x8] sm:$0xf]
        %v213 = vld [vmem:[%s179 + $0xc] sm:$0xf]
        %v214 = vld [vmem:[%s179 + $0x10] sm:$0xf]
        %v215 = vld [vmem:[%s179 + $0x14] sm:$0xf]
        %v216 = vld [vmem:[%s179 + $0x18] sm:$0xf]
        %v217 = vld [vmem:[%s179 + $0x1c] sm:$0xf]
        %v218 = vld [vmem:[#allocation5] sm:$0xf]
        %v219 = vld [vmem:[#allocation5 + $0x4] sm:$0xf]
        %v220 = vld [vmem:[#allocation5 + $0x8] sm:$0xf]
        %v221 = vld [vmem:[#allocation5 + $0xc] sm:$0xf]
        %v222 = vld [vmem:[#allocation5 + $0x10] sm:$0xf]
        %v223 = vld [vmem:[#allocation5 + $0x14] sm:$0xf]
        %v224 = vld [vmem:[#allocation5 + $0x18] sm:$0xf]
        %v225 = vld [vmem:[#allocation5 + $0x1c] sm:$0xf]
        %v226 = vld [vmem:[#allocation5 + $0x20] sm:$0xf]
        %v227 = vld [vmem:[#allocation5 + $0x24] sm:$0xf]
        %v228 = vld [vmem:[#allocation5 + $0x28] sm:$0xf]
        %v229 = vld [vmem:[#allocation5 + $0x2c] sm:$0xf]
        %v230 = vld [vmem:[#allocation5 + $0x30] sm:$0xf]
        %v231 = vld [vmem:[#allocation5 + $0x34] sm:$0xf]
        %v232 = vld [vmem:[#allocation5 + $0x38] sm:$0xf]
        %v233 = vld [vmem:[#allocation5 + $0x3c] sm:$0xf]
        %v234 = vld [vmem:[%s2] sm:$0x1]
        %v236 = vperm.slane %v234, 0
        %v246 = vunpack.c.l.b16 %v210
        %v247 = vunpack.c.l.b16 %v211
        %v248 = vunpack.c.l.b16 %v212
        %v249 = vunpack.c.l.b16 %v213
        %v250 = vunpack.c.l.b16 %v214
        %v251 = vunpack.c.l.b16 %v215
        %v252 = vunpack.c.l.b16 %v216
        %v253 = vunpack.c.l.b16 %v217
        %v254 = vpack.c.b16 %v247, %v246
        %v255 = vpack.c.b16 %v249, %v248
        %v256 = vpack.c.b16 %v251, %v250
        %v257 = vpack.c.b16 %v253, %v252
        %v278 = vunpack.c.l.b16 %v218
        %v279 = vunpack.c.l.b16 %v219
        %v280 = vunpack.c.l.b16 %v220
        %v281 = vunpack.c.l.b16 %v221
        %v282 = vunpack.c.l.b16 %v222
        %v283 = vunpack.c.l.b16 %v223
        %v284 = vunpack.c.l.b16 %v224
        %v285 = vunpack.c.l.b16 %v225
        %v286 = vunpack.c.l.b16 %v226
        %v287 = vunpack.c.l.b16 %v227
        %v288 = vunpack.c.l.b16 %v228
        %v289 = vunpack.c.l.b16 %v229
        %v290 = vunpack.c.l.b16 %v230
        %v291 = vunpack.c.l.b16 %v231
        %v292 = vunpack.c.l.b16 %v232
        %v293 = vunpack.c.l.b16 %v233
        %v294 = vpack.c.b16 %v279, %v278
        %v295 = vpack.c.b16 %v281, %v280
        %v296 = vpack.c.b16 %v283, %v282
        %v297 = vpack.c.b16 %v285, %v284
        %v298 = vpack.c.b16 %v287, %v286
        %v299 = vpack.c.b16 %v289, %v288
        %v300 = vpack.c.b16 %v291, %v290
        %v301 = vpack.c.b16 %v293, %v292
        %310 = vmatpush.bf16.msra.mxu0 %v301
        %311 = vmatpush.bf16.msra.mxu0 %v300
        %312 = vmatpush.bf16.msra.mxu0 %v299
        %313 = vmatpush.bf16.msra.mxu0 %v298
        %314 = vmatpush.bf16.msra.mxu0 %v297
        %315 = vmatpush.bf16.msra.mxu0 %v296
        %316 = vmatpush.bf16.msra.mxu0 %v295
        %317 = vmatpush.bf16.msra.mxu0 %v294
        %318 = vmatmul.bf16.gmra.mxu0 %v254
        %v319 = vpop.f32.mrf.mxu0
        %v320 = vadd.f32 %v236, %v319
        %v321 = vpop.f32.mrf.mxu0
        %v322 = vadd.f32 %v236, %v321
        %323 = vmatmul.bf16.gmra.mxu0 %v255
        %v324 = vpop.f32.mrf.mxu0
        %v325 = vadd.f32 %v236, %v324
        %v326 = vpop.f32.mrf.mxu0
        %v327 = vadd.f32 %v236, %v326
        %328 = vmatmul.bf16.gmra.mxu0 %v256
        %v329 = vpop.f32.mrf.mxu0
        %v330 = vadd.f32 %v236, %v329
        %v331 = vpop.f32.mrf.mxu0
        %v332 = vadd.f32 %v236, %v331
        %333 = vmatmul.bf16.gmra.mxu0 %v257
        %v334 = vpop.f32.mrf.mxu0
        %v335 = vadd.f32 %v236, %v334
        %v336 = vpop.f32.mrf.mxu0
        %v337 = vadd.f32 %v236, %v336
        %338 = vdwg.mxu0
        %v339 = vpack.c.bf16 %v320, %v320
        %v340 = vpack.c.bf16 %v322, %v322
        %v341 = vpack.c.bf16 %v325, %v325
        %v342 = vpack.c.bf16 %v327, %v327
        %v343 = vpack.c.bf16 %v330, %v330
        %v344 = vpack.c.bf16 %v332, %v332
        %v345 = vpack.c.bf16 %v335, %v335
        %v346 = vpack.c.bf16 %v337, %v337
        %347 = vst [vmem:[%s207] sm:$0xf] %v339
        %348 = vst [vmem:[%s207 + $0x4] sm:$0xf] %v340
        %349 = vst [vmem:[%s207 + $0x8] sm:$0xf] %v341
        %350 = vst [vmem:[%s207 + $0xc] sm:$0xf] %v342
        %351 = vst [vmem:[%s207 + $0x10] sm:$0xf] %v343
        %352 = vst [vmem:[%s207 + $0x14] sm:$0xf] %v344
        %353 = vst [vmem:[%s207 + $0x18] sm:$0xf] %v345
        %354 = vst [vmem:[%s207 + $0x1c] sm:$0xf] %v346
        %s355 = sand.u32 %s97, 1
        %s356 = scalar_lea.sflag [#allocation4], %s355
        %s357 = sand.u32 %s97, 1
        %s358 = smul.addr %s357, 32
        %s359 = scalar_lea.vmem [#allocation7], %s358
        // Predicated region
        $region41: #{tpu_custom_call.1} parent=31 // pred_check
          %p360 = pneg %p107
        $region42: #{tpu_custom_call.1} parent=31 // pred_check_branch
          %362 = sbr.rel (%p360) target = $region44
        $region43: #{tpu_custom_call.1} parent=31 // pred_region
          %s363 = smul.u32 8, %s21
          %365 = vsyncadd %s356, 0
          %s366 = smul.addr %s363, 4
          %s367 = scalar_lea.hbm %s3, %s366
          %s368 = sshll.u32 %s359, 4
          %s369 = int_to_ptr.vmem [resolvable:$true] %s368
          %s370 = sshll.u32 %s367, 4
          %s371 = int_to_ptr.hbm [resolvable:$true] %s370
          %376 = dma.vmem_to_hbm [thread:$0]  %s369, 512, %s371, %s356, 64, 64, 4
        $region44: #{tpu_custom_call.1} parent=31 // pred_fallthru
          _
      $region32: #{tpu_custom_call.1} parent=5 // pred_fallthru
        _
      %p377 = scmp.le.s32.totalorder 2, %s16
      // Predicated region
      $region45: #{tpu_custom_call.1} parent=5 // pred_check
        %p378 = pneg %p377
      $region46: #{tpu_custom_call.1} parent=5 // pred_check_branch
        %380 = sbr.rel (%p378) target = $region48
      $region47: #{tpu_custom_call.1} parent=5 // pred_region
        %s381 = ssub.s32 %s16, 2
        // Predicated region
        $region49: #{tpu_custom_call.1} parent=47 // pred_check
          %p382 = pneg %p113
        $region50: #{tpu_custom_call.1} parent=47 // pred_check_branch
          %384 = sbr.rel (%p382) target = $region52
        $region51: #{tpu_custom_call.1} parent=47 // pred_region
          %s385 = sand.u32 %s98, 1
          %s386 = scalar_lea.sflag [#allocation4], %s385
          %s387 = sand.u32 %s98, 1
          %s388 = smul.addr %s387, 32
          %s389 = scalar_lea.vmem [#allocation7], %s388
          %391 = dma.done %s386, 512
        $region52: #{tpu_custom_call.1} parent=47 // pred_fallthru
          _
      $region48: #{tpu_custom_call.1} parent=5 // pred_fallthru
        _
    $region6: #{tpu_custom_call.1} parent=1 // loop_footer
      %s20 = sadd.s32 1, %s16
    $region7: #{tpu_custom_call.1} parent=1 // loop_footer_branch
      %15 = sbr.rel target = $region3
    $region8: #{tpu_custom_call.1} parent=1 // loop_exit
      _
    %392 = vsyncpa [#allocation3], 1
    %s393 = scalar_lea.sflag [#allocation3], 1
    %394 = vsyncpa %s393, 1
    %395 = vsyncpa [#allocation6], 1
    %396 = vsyncpa [#allocation4], 1
    %s397 = scalar_lea.sflag [#allocation4], 1
    %398 = vsyncpa %s397, 1

</llo_original>
